<compile_context>
chip_gen: v6e
topology: v6e:2x2x1
jax: 0.10.0
libtpu: 0.0.40
codegen_flags: <defaults>
</compile_context>

<pallas_src>
import functools
import math

import jax
import jax.numpy as jnp
from jax import lax
from jax.experimental import pallas as pl
from jax.experimental.pallas import tpu as pltpu


def _round_up(a, b):
    return (a + b - 1) // b * b


# ----------------------------------------------------------------------------
# Kernel 1/3 and 3/3: row-tiled Linear (y = x @ W + b), f32 accumulation on MXU.
# ----------------------------------------------------------------------------
def _linear_kernel(x_ref, w_ref, b_ref, o_ref):
    acc = jnp.dot(x_ref[...], w_ref[...], preferred_element_type=jnp.float32)
    acc = acc + b_ref[...].astype(jnp.float32)            # (1, N) broadcast
    o_ref[...] = acc.astype(o_ref.dtype)


def linear_pallas(x2d, w, b, *, row_tile=256):
    """x2d: (rows, K), w: (K, N), b: (N,) -> (rows, N)."""
    rows, k_dim = x2d.shape
    k_dim2, n_dim = w.shape
    assert k_dim == k_dim2
    # Large row tiles amortise the per-grid-step pipeline overhead; clamp for tiny
    # inputs, keep the tile a multiple of 8 sublanes, and zero-pad ragged rows
    # (padded rows only see the bias and are sliced off afterwards).
    rt = min(row_tile, _round_up(rows, 8))
    rows_p = _round_up(rows, rt)
    if rows_p != rows:
        x2d = jnp.pad(x2d, ((0, rows_p - rows), (0, 0)))

    out = pl.pallas_call(
        _linear_kernel,
        out_shape=jax.ShapeDtypeStruct((rows_p, n_dim), x2d.dtype),
        grid_spec=pltpu.PrefetchScalarGridSpec(
            num_scalar_prefetch=0,
            grid=(rows_p // rt,),
            in_specs=[
                pl.BlockSpec((rt, k_dim), lambda i: (i, 0)),     # row tile of x
                pl.BlockSpec((k_dim, n_dim), lambda i: (0, 0)),  # weight, resident
                pl.BlockSpec((1, n_dim), lambda i: (0, 0)),      # bias, resident
            ],
            out_specs=pl.BlockSpec((rt, n_dim), lambda i: (i, 0)),
        ),
        compiler_params=pltpu.CompilerParams(
            dimension_semantics=("parallel",),
            vmem_limit_bytes=32 * 1024 * 1024,
        ),
    )(x2d, w, b.reshape(1, n_dim))
    return out[:rows]


# ----------------------------------------------------------------------------
# Kernel 2/3: attention core with fused RoPE, grid over (batch, q_head).
# ----------------------------------------------------------------------------
def _attention_kernel(q_ref, k_ref, v_ref, cos_ref, sin_ref, mask_ref, o_ref, *,
                      scale, d_half):
    q = q_ref[0, 0].astype(jnp.float32)      # (S, D) in [even | odd] feature order
    k = k_ref[0, 0].astype(jnp.float32)      # (S, D)
    v = v_ref[0, 0].astype(jnp.float32)      # (S, D)
    cos = cos_ref[...]                       # (S, D/2) f32
    sin = sin_ref[...]                       # (S, D/2) f32

    # rotate-half RoPE on the permuted layout (== interleaved RoPE on original).
    q1, q2 = q[:, :d_half], q[:, d_half:]
    k1, k2 = k[:, :d_half], k[:, d_half:]
    q1r = q1 * cos - q2 * sin
    q2r = q2 * cos + q1 * sin
    k1r = k1 * cos - k2 * sin
    k2r = k2 * cos + k1 * sin

    # scores = roped_q @ roped_k^T, as the sum of the two half products
    # (avoids re-concatenating the halves along lanes).
    dn = (((1,), (1,)), ((), ()))
    s = lax.dot_general(q1r, k1r, dn, preferred_element_type=jnp.float32)
    s = s + lax.dot_general(q2r, k2r, dn, preferred_element_type=jnp.float32)
    s = s * scale + mask_ref[0, 0].astype(jnp.float32)

    m = jnp.max(s, axis=-1, keepdims=True)
    e = jnp.exp(s - m)
    p = e / jnp.sum(e, axis=-1, keepdims=True)

    out = jnp.dot(p, v, preferred_element_type=jnp.float32)     # (S, D)
    o_ref[0, 0] = out.astype(o_ref.dtype)


def attention_pallas(q, k, v, cos, sin, mask, *, num_kv_groups):
    """q: (B, Hq, S, D), k/v: (B, Hkv, S, D), cos/sin: (S, D/2), mask: (B,1,S,S)."""
    b_dim, hq, s_dim, d_dim = q.shape
    scale = 1.0 / math.sqrt(d_dim)
    kernel = functools.partial(_attention_kernel, scale=scale, d_half=d_dim // 2)
    return pl.pallas_call(
        kernel,
        out_shape=jax.ShapeDtypeStruct((b_dim, hq, s_dim, d_dim), q.dtype),
        grid_spec=pltpu.PrefetchScalarGridSpec(
            num_scalar_prefetch=0,
            grid=(b_dim, hq),
            in_specs=[
                pl.BlockSpec((1, 1, s_dim, d_dim), lambda b, h: (b, h, 0, 0)),
                # GQA: q head h reads kv head h // groups (no repeat_interleave).
                pl.BlockSpec((1, 1, s_dim, d_dim),
                             lambda b, h: (b, h // num_kv_groups, 0, 0)),
                pl.BlockSpec((1, 1, s_dim, d_dim),
                             lambda b, h: (b, h // num_kv_groups, 0, 0)),
                pl.BlockSpec((s_dim, d_dim // 2), lambda b, h: (0, 0)),
                pl.BlockSpec((s_dim, d_dim // 2), lambda b, h: (0, 0)),
                pl.BlockSpec((1, 1, s_dim, s_dim), lambda b, h: (b, 0, 0, 0)),
            ],
            out_specs=pl.BlockSpec((1, 1, s_dim, d_dim), lambda b, h: (b, h, 0, 0)),
        ),
        compiler_params=pltpu.CompilerParams(
            dimension_semantics=("parallel", "parallel"),
            vmem_limit_bytes=32 * 1024 * 1024,
        ),
    )(q, k, v, cos, sin, mask)


# ----------------------------------------------------------------------------
# Wrapper: full AttentionLayer.forward (self-attention, kv_cache=None, xa=None).
# ----------------------------------------------------------------------------
def _deinterleave_perm(num_heads, head_dim):
    # per-head feature permutation: [0,2,4,...,D-2, 1,3,5,...,D-1]
    per_head = jnp.concatenate(
        [jnp.arange(0, head_dim, 2), jnp.arange(1, head_dim, 2)])
    return (jnp.arange(num_heads)[:, None] * head_dim + per_head[None, :]).reshape(-1)


def attention_layer_forward(x, attention_mask, rope_cache, params, *,
                            num_attention_heads, num_key_value_heads, head_dim,
                            dropout_prob=0.0):
    # TODO(synk): attention dropout (dropout_prob > 0) and the kv_cache/input_pos
    # decode path are not implemented (module defaults: kv_cache=None, dropout=0).
    del dropout_prob
    wq, bq, wk, bk, wv, bv, wo = params
    b_dim, s_dim, hidden = x.shape
    hq, hkv, d_dim = num_attention_heads, num_key_value_heads, head_dim
    groups = hq // hkv
    rot_dim = rope_cache.shape[-2] * 2
    # TODO(synk): partial rotary embedding (rot_dim < head_dim) not supported.
    assert rot_dim == d_dim, "partial rotary (rot_dim < head_dim) not supported"

    # Permute q/k projection output features per head to [even | odd] so RoPE can
    # be applied in rotate-half form inside the attention kernel (see header).
    perm_q = _deinterleave_perm(hq, d_dim)
    perm_k = _deinterleave_perm(hkv, d_dim)
    w_qkv = jnp.concatenate([wq[:, perm_q], wk[:, perm_k], wv], axis=1)
    b_qkv = jnp.concatenate([bq[perm_q], bk[perm_k], bv])

    # (1) fused QKV projection.
    x2d = x.reshape(b_dim * s_dim, hidden)
    qkv = linear_pallas(x2d, w_qkv, b_qkv)
    nq, nk = hq * d_dim, hkv * d_dim
    q = qkv[:, :nq].reshape(b_dim, s_dim, hq, d_dim).transpose(0, 2, 1, 3)
    k = qkv[:, nq:nq + nk].reshape(b_dim, s_dim, hkv, d_dim).transpose(0, 2, 1, 3)
    v = qkv[:, nq + nk:].reshape(b_dim, s_dim, hkv, d_dim).transpose(0, 2, 1, 3)

    # (2) attention core (RoPE fused in-kernel, GQA via index_map).
    cos = rope_cache[..., 0].astype(jnp.float32)       # (S, D/2)
    sin = rope_cache[..., 1].astype(jnp.float32)
    mask = jnp.broadcast_to(attention_mask,
                            (b_dim, 1, s_dim, s_dim)).astype(x.dtype)
    ctx = attention_pallas(q, k, v, cos, sin, mask, num_kv_groups=groups)

    # (3) output projection (no bias).
    ctx2d = ctx.transpose(0, 2, 1, 3).reshape(b_dim * s_dim, hq * d_dim)
    out = linear_pallas(ctx2d, wo, jnp.zeros((hidden,), wo.dtype))
    return out.reshape(b_dim, s_dim, hidden)


# ----------------------------------------------------------------------------
# Pure-JAX reference (faithful port of the torch module) + rope cache builder.
# ----------------------------------------------------------------------------
def gen_rope_cache(max_seq_length, n_elem, base=10000):
    theta = 1.0 / (base ** (jnp.arange(0, n_elem, 2, dtype=jnp.float32) / n_elem))
    seq_idx = jnp.arange(max_seq_length, dtype=jnp.float32)
    idx_theta = jnp.outer(seq_idx, theta)
    return jnp.stack([jnp.cos(idx_theta), jnp.sin(idx_theta)], axis=-1)


def _apply_rotary_ref(x, rope_cache):
    b, s, h, d = x.shape
    rot = rope_cache.shape[-2] * 2
    xr, xp = x[..., :rot], x[..., rot:]
    xs = xr.reshape(b, s, h, rot // 2, 2)
    rc = rope_cache.reshape(1, s, 1, rot // 2, 2)
    out = jnp.stack(
        [xs[..., 0] * rc[..., 0] - xs[..., 1] * rc[..., 1],
         xs[..., 1] * rc[..., 0] + xs[..., 0] * rc[..., 1]], axis=-1)
    out = out.reshape(b, s, h, rot)
    return jnp.concatenate([out, xp], axis=-1)


def attention_layer_ref(x, attention_mask, rope_cache, params, *,
                        num_attention_heads, num_key_value_heads, head_dim):
    prec = lax.Precision.HIGHEST
    wq, bq, wk, bk, wv, bv, wo = params
    b, s, _ = x.shape
    hq, hkv, d = num_attention_heads, num_key_value_heads, head_dim
    q = jnp.dot(x, wq, precision=prec) + bq
    k = jnp.dot(x, wk, precision=prec) + bk
    v = jnp.dot(x, wv, precision=prec) + bv
    q = q.reshape(b, s, hq, d)
    k = k.reshape(b, s, hkv, d)
    v = v.reshape(b, s, hkv, d)
    q = _apply_rotary_ref(q, rope_cache)
    k = _apply_rotary_ref(k, rope_cache)
    q, k, v = (jnp.transpose(t, (0, 2, 1, 3)) for t in (q, k, v))
    g = hq // hkv
    k = jnp.repeat(k, g, axis=1)
    v = jnp.repeat(v, g, axis=1)
    scores = jnp.einsum('bhqd,bhkd->bhqk', q, k, precision=prec) / math.sqrt(d)
    scores = scores + attention_mask
    probs = jax.nn.softmax(scores, axis=-1)
    ctx = jnp.einsum('bhqk,bhkd->bhqd', probs, v, precision=prec)
    ctx = jnp.transpose(ctx, (0, 2, 1, 3)).reshape(b, s, hq * d)
    return jnp.dot(ctx, wo, precision=prec)


if __name__ == "__main__":
    # Small shapes consistent with the module.
    batch, seq = 2, 8
    hidden, n_heads, n_kv_heads = 128, 4, 2
    head_dim = hidden // n_heads          # 32
    dtype = jnp.float32                   # config.dtype

    key = jax.random.PRNGKey(0)
    ks = jax.random.split(key, 9)
    x = jax.random.normal(ks[0], (batch, seq, hidden), dtype)
    wq = jax.random.normal(ks[1], (hidden, n_heads * head_dim), dtype) / math.sqrt(hidden)
    bq = 0.1 * jax.random.normal(ks[2], (n_heads * head_dim,), dtype)
    wk = jax.random.normal(ks[3], (hidden, n_kv_heads * head_dim), dtype) / math.sqrt(hidden)
    bk = 0.1 * jax.random.normal(ks[4], (n_kv_heads * head_dim,), dtype)
    wv = jax.random.normal(ks[5], (hidden, n_kv_heads * head_dim), dtype) / math.sqrt(hidden)
    bv = 0.1 * jax.random.normal(ks[6], (n_kv_heads * head_dim,), dtype)
    wo = jax.random.normal(ks[7], (n_heads * head_dim, hidden), dtype) / math.sqrt(n_heads * head_dim)
    params = (wq, bq, wk, bk, wv, bv, wo)

    rope_cache = gen_rope_cache(seq, head_dim)                   # (S, D/2, 2)
    causal = jnp.tril(jnp.ones((seq, seq), dtype=bool))
    attention_mask = jnp.where(causal, 0.0, -1e9).astype(dtype)[None, None]
    attention_mask = jnp.broadcast_to(attention_mask, (batch, 1, seq, seq))

    out = attention_layer_forward(
        x, attention_mask, rope_cache, params,
        num_attention_heads=n_heads, num_key_value_heads=n_kv_heads,
        head_dim=head_dim)
    out = jax.block_until_ready(out)

    ref = attention_layer_ref(
        x, attention_mask, rope_cache, params,
        num_attention_heads=n_heads, num_key_value_heads=n_kv_heads,
        head_dim=head_dim)
    assert out.shape == (batch, seq, hidden) and out.dtype == dtype
    err = jnp.max(jnp.abs(out - ref))
    assert float(err) < 5e-2, f"max abs error {err}"
    print("KERNEL_OK")
</pallas_src>

<mosaic_0001>
module attributes {stable_mosaic.version = 11 : i64} {
  func.func @_linear_kernel(%arg0: i32, %arg1: memref<16x128xf32, #tpu.memory_space<vmem>>, %arg2: memref<128x256xf32, #tpu.memory_space<vmem>>, %arg3: memref<1x256xf32, #tpu.memory_space<vmem>>, %arg4: memref<16x256xf32, #tpu.memory_space<vmem>>) attributes {dimension_semantics = [#tpu.dimension_semantics<parallel>], iteration_bounds = array<i64: 1>, scalar_prefetch = 0 : i64, scratch_operands = 0 : i64, tpu.core_type = #tpu.core_type<tc>, window_params = [{transform_indices = @transform_0, window_bounds = array<i64: 16, 128>}, {pipeline_mode = #tpu.pipeline_mode<synchronous>, transform_indices = @transform_1, window_bounds = array<i64: 128, 256>}, {pipeline_mode = #tpu.pipeline_mode<synchronous>, transform_indices = @transform_2, window_bounds = array<i64: 1, 256>}, {transform_indices = @transform_3, window_bounds = array<i64: 16, 256>}]} {
    %c0 = arith.constant 0 : index
    %c0_0 = arith.constant 0 : index
    %0 = vector.load %arg1[%c0, %c0_0] : memref<16x128xf32, #tpu.memory_space<vmem>>, vector<16x128xf32>
    %c0_1 = arith.constant 0 : index
    %c0_2 = arith.constant 0 : index
    %1 = vector.load %arg2[%c0_1, %c0_2] : memref<128x256xf32, #tpu.memory_space<vmem>>, vector<128x256xf32>
    %cst = arith.constant dense<0.000000e+00> : vector<16x256xf32>
    %2 = tpu.matmul %0, %1, %cst {dimension_numbers = #tpu.dot_dimension_numbers<[1], [0], [0], [1], [0, 0, 1, 1], [], []>} : vector<16x128xf32>, vector<128x256xf32>, vector<16x256xf32> -> vector<16x256xf32>
    %c0_3 = arith.constant 0 : index
    %c0_4 = arith.constant 0 : index
    %3 = vector.load %arg3[%c0_3, %c0_4] : memref<1x256xf32, #tpu.memory_space<vmem>>, vector<1x256xf32>
    %4 = vector.broadcast %3 : vector<1x256xf32> to vector<16x256xf32>
    %5 = arith.addf %2, %4 : vector<16x256xf32>
    %c0_5 = arith.constant 0 : index
    %c0_6 = arith.constant 0 : index
    %6 = vector.load %arg4[%c0_5, %c0_6] : memref<16x256xf32, #tpu.memory_space<vmem>>, vector<16x256xf32>
    tpu.vector_store %arg4[%c0_5, %c0_6], %5 {strides = array<i32>} : memref<16x256xf32, #tpu.memory_space<vmem>>, vector<16x256xf32>,
    return
  }
  func.func @transform_0(%arg0: i32) -> (i32, i32) {
    %c0_i32 = arith.constant 0 : i32
    %c0_i32_0 = arith.constant 0 : i32
    return %arg0, %c0_i32 : i32, i32
  }
  func.func @transform_1(%arg0: i32) -> (i32, i32) {
    %c0_i32 = arith.constant 0 : i32
    %c0_i32_0 = arith.constant 0 : i32
    %c0_i32_1 = arith.constant 0 : i32
    return %c0_i32, %c0_i32_0 : i32, i32
  }
  func.func @transform_2(%arg0: i32) -> (i32, i32) {
    %c0_i32 = arith.constant 0 : i32
    %c0_i32_0 = arith.constant 0 : i32
    %c0_i32_1 = arith.constant 0 : i32
    return %c0_i32, %c0_i32_0 : i32, i32
  }
  func.func @transform_3(%arg0: i32) -> (i32, i32) {
    %c0_i32 = arith.constant 0 : i32
    %c0_i32_0 = arith.constant 0 : i32
    return %arg0, %c0_i32 : i32, i32
  }
}

</mosaic_0001>

<llo_original>
// kernel: tpu_custom_call.1
$region0: #{tpu_custom_call.1}
  #allocation0 [shape = 'u32[]', space=smem, size = 0x4, offset = 0x4, fixed_abs, tag = 'smem constant byte address 0x4 - core index']
  #allocation1 [shape = 'u32[144,128]{1,0:T(1,128)}', space=vmem, size = 0x12000, scoped, tag = 'internal scratch']
  %s0 = inlined_call_operand.hbm [shape: f32[16,128], index: 0, kind: input, shape index: {}]
  %s1 = inlined_call_operand.hbm [shape: f32[128,256], index: 1, kind: input, shape index: {}]
  %s2 = inlined_call_operand.vmem [shape: f32[1,256], index: 2, kind: input, shape index: {}]
  %s3 = inlined_call_operand.hbm [shape: f32[16,256], index: 3, kind: output, shape index: {}]
  %s4 = sld [smem:[#allocation0]]
  $region30: #{tpu_custom_call.1} parent=0
    _
  %s6 = ssub.s32 1, %s4
  %s7 = scalar_select 0, %s6, %s4
  $region1: #{tpu_custom_call.1} parent=0
    #allocation2 [shape = 'u8[8192]{0}', space=vmem, size = 0x2000, scoped, tag = 'input window, operand 0, single buffered']
    #allocation3 [shape = 's32[1]{0}', space=sflag, size = 0x4, scoped, tag = 'scoped memory for tpu_custom_call.1']
    #allocation4 [shape = 's32[1]{0}', space=sflag, size = 0x4, scoped, tag = 'scoped memory for tpu_custom_call.1']
    #allocation5 [shape = 'u8[131072]{0}', space=vmem, size = 0x20000, scoped, tag = 'input window, operand 1, single buffered']
    #allocation6 [shape = 's32[1]{0}', space=sflag, size = 0x4, scoped, tag = 'scoped memory for tpu_custom_call.1']
    #allocation7 [shape = 'u8[16384]{0}', space=vmem, size = 0x4000, scoped, tag = 'output window, operand 0, single buffered']
    %8 = vsyncpa [#allocation3], 0
    %9 = vsyncpa [#allocation6], 0
    %10 = vsyncpa [#allocation4], 0
    // Predicated region
    $region2: #{tpu_custom_call.1} parent=1 // pred_check
      _
    $region3: #{tpu_custom_call.1} parent=1 // pred_check_branch
      %12 = sbr.rel (0) target = $region5
    $region4: #{tpu_custom_call.1} parent=1 // pred_region
      %s14 = ssub.s32 256, 256
      %15 = vsyncadd [#allocation3], %s14
      %s16 = sshll.u32 [#allocation2], 4
      %s17 = int_to_ptr.vmem [resolvable:$true] %s16
      %22 = dma.hbm_to_vmem [thread:$0]  %s0, 256, %s17, [#allocation3], 128, 128, 8
    $region5: #{tpu_custom_call.1} parent=1 // pred_fallthru
      _
    // Predicated region
    $region6: #{tpu_custom_call.1} parent=1 // pred_check
      _
    $region7: #{tpu_custom_call.1} parent=1 // pred_check_branch
      %24 = sbr.rel (0) target = $region9
    $region8: #{tpu_custom_call.1} parent=1 // pred_region
      %s26 = ssub.s32 4096, 4096
      %27 = vsyncadd [#allocation6], %s26
      %s28 = sshll.u32 [#allocation5], 4
      %s29 = int_to_ptr.vmem [resolvable:$true] %s28
      %34 = dma.hbm_to_vmem [thread:$0]  %s1, 4096, %s29, [#allocation6], 256, 256, 16
    $region9: #{tpu_custom_call.1} parent=1 // pred_fallthru
      _
    // Predicated region
    $region10: #{tpu_custom_call.1} parent=1 // pred_check
      _
    $region11: #{tpu_custom_call.1} parent=1 // pred_check_branch
      %36 = sbr.rel (0) target = $region13
    $region12: #{tpu_custom_call.1} parent=1 // pred_region
      _
    $region13: #{tpu_custom_call.1} parent=1 // pred_fallthru
      _
    // Predicated region
    $region14: #{tpu_custom_call.1} parent=1 // pred_check
      _
    $region15: #{tpu_custom_call.1} parent=1 // pred_check_branch
      %38 = sbr.rel (0) target = $region17
    $region16: #{tpu_custom_call.1} parent=1 // pred_region
      %39 = dma.done [#allocation3], 256
    $region17: #{tpu_custom_call.1} parent=1 // pred_fallthru
      _
    // Predicated region
    $region18: #{tpu_custom_call.1} parent=1 // pred_check
      _
    $region19: #{tpu_custom_call.1} parent=1 // pred_check_branch
      %41 = sbr.rel (0) target = $region21
    $region20: #{tpu_custom_call.1} parent=1 // pred_region
      %42 = dma.done [#allocation6], 4096
    $region21: #{tpu_custom_call.1} parent=1 // pred_fallthru
      _
    %v43 = vld [vmem:[#allocation2] sm:$0xff]
    %v44 = vld [vmem:[#allocation2 + $0x8] sm:$0xff]
    %v45 = vld [vmem:[#allocation5] sm:$0xff]
    %v46 = vld [vmem:[#allocation5 + $0x8] sm:$0xff]
    %v47 = vld [vmem:[#allocation5 + $0x10] sm:$0xff]
    %v48 = vld [vmem:[#allocation5 + $0x18] sm:$0xff]
    %v49 = vld [vmem:[#allocation5 + $0x20] sm:$0xff]
    %v50 = vld [vmem:[#allocation5 + $0x28] sm:$0xff]
    %v51 = vld [vmem:[#allocation5 + $0x30] sm:$0xff]
    %v52 = vld [vmem:[#allocation5 + $0x38] sm:$0xff]
    %v53 = vld [vmem:[#allocation5 + $0x40] sm:$0xff]
    %v54 = vld [vmem:[#allocation5 + $0x48] sm:$0xff]
    %v55 = vld [vmem:[#allocation5 + $0x50] sm:$0xff]
    %v56 = vld [vmem:[#allocation5 + $0x58] sm:$0xff]
    %v57 = vld [vmem:[#allocation5 + $0x60] sm:$0xff]
    %v58 = vld [vmem:[#allocation5 + $0x68] sm:$0xff]
    %v59 = vld [vmem:[#allocation5 + $0x70] sm:$0xff]
    %v60 = vld [vmem:[#allocation5 + $0x78] sm:$0xff]
    %v61 = vld [vmem:[#allocation5 + $0x80] sm:$0xff]
    %v62 = vld [vmem:[#allocation5 + $0x88] sm:$0xff]
    %v63 = vld [vmem:[#allocation5 + $0x90] sm:$0xff]
    %v64 = vld [vmem:[#allocation5 + $0x98] sm:$0xff]
    %v65 = vld [vmem:[#allocation5 + $0xa0] sm:$0xff]
    %v66 = vld [vmem:[#allocation5 + $0xa8] sm:$0xff]
    %v67 = vld [vmem:[#allocation5 + $0xb0] sm:$0xff]
    %v68 = vld [vmem:[#allocation5 + $0xb8] sm:$0xff]
    %v69 = vld [vmem:[#allocation5 + $0xc0] sm:$0xff]
    %v70 = vld [vmem:[#allocation5 + $0xc8] sm:$0xff]
    %v71 = vld [vmem:[#allocation5 + $0xd0] sm:$0xff]
    %v72 = vld [vmem:[#allocation5 + $0xd8] sm:$0xff]
    %v73 = vld [vmem:[#allocation5 + $0xe0] sm:$0xff]
    %v74 = vld [vmem:[#allocation5 + $0xe8] sm:$0xff]
    %v75 = vld [vmem:[#allocation5 + $0xf0] sm:$0xff]
    %v76 = vld [vmem:[#allocation5 + $0xf8] sm:$0xff]
    %v77 = vld [vmem:[%s2] sm:$0x3]
    %v79 = vlaneseq
    %v80 = vshrl.u32 %v79, 7
    %v81 = vsub.s32 0, %v80
    %v82 = vrot.slane %v77, %v81
    %v83 = vlaneseq
    %v84 = vshrl.u32 %v83, 7
    %v85 = vsub.s32 1, %v84
    %v86 = vrot.slane %v77, %v85
    %89 = vmatprep.subr.mxu0 %v76
    %90 = vmatpush1.msra.mxu0 %v75
    %91 = vmatprep.subr.mxu0 %v74
    %92 = vmatpush1.msra.mxu0 %v73
    %93 = vmatprep.subr.mxu0 %v72
    %94 = vmatpush1.msra.mxu0 %v71
    %95 = vmatprep.subr.mxu0 %v70
    %96 = vmatpush1.msra.mxu0 %v69
    %97 = vmatprep.subr.mxu0 %v68
    %98 = vmatpush1.msra.mxu0 %v67
    %99 = vmatprep.subr.mxu0 %v66
    %100 = vmatpush1.msra.mxu0 %v65
    %101 = vmatprep.subr.mxu0 %v64
    %102 = vmatpush1.msra.mxu0 %v63
    %103 = vmatprep.subr.mxu0 %v62
    %104 = vmatpush1.msra.mxu0 %v61
    %105 = vmatprep.subr.mxu0 %v60
    %106 = vmatpush1.msra.mxu0 %v59
    %107 = vmatprep.subr.mxu0 %v58
    %108 = vmatpush1.msra.mxu0 %v57
    %109 = vmatprep.subr.mxu0 %v56
    %110 = vmatpush1.msra.mxu0 %v55
    %111 = vmatprep.subr.mxu0 %v54
    %112 = vmatpush1.msra.mxu0 %v53
    %113 = vmatprep.subr.mxu0 %v52
    %114 = vmatpush1.msra.mxu0 %v51
    %115 = vmatprep.subr.mxu0 %v50
    %116 = vmatpush1.msra.mxu0 %v49
    %117 = vmatprep.subr.mxu0 %v48
    %118 = vmatpush1.msra.mxu0 %v47
    %119 = vmatprep.subr.mxu0 %v46
    %120 = vmatpush1.msra.mxu0 %v45
    %121 = vmatprep.subr.mxu0 0.0
    %122 = vmatpush2.msra.mxu0 0.0
    %123 = vmatprep.subr.mxu0 0.0
    %124 = vmatpush2.msra.mxu0 0.0
    %125 = vmatprep.subr.mxu0 0.0
    %126 = vmatpush2.msra.mxu0 0.0
    %127 = vmatprep.subr.mxu0 0.0
    %128 = vmatpush2.msra.mxu0 0.0
    %129 = vmatprep.subr.mxu0 0.0
    %130 = vmatpush2.msra.mxu0 0.0
    %131 = vmatprep.subr.mxu0 0.0
    %132 = vmatpush2.msra.mxu0 0.0
    %133 = vmatprep.subr.mxu0 0.0
    %134 = vmatpush2.msra.mxu0 0.0
    %135 = vmatprep.subr.mxu0 0.0
    %136 = vmatpush2.msra.mxu0 0.0
    %137 = vmatprep.subr.mxu0 0.0
    %138 = vmatpush2.msra.mxu0 0.0
    %139 = vmatprep.subr.mxu0 0.0
    %140 = vmatpush2.msra.mxu0 0.0
    %141 = vmatprep.subr.mxu0 0.0
    %142 = vmatpush2.msra.mxu0 0.0
    %143 = vmatprep.subr.mxu0 0.0
    %144 = vmatpush2.msra.mxu0 0.0
    %145 = vmatprep.subr.mxu0 0.0
    %146 = vmatpush2.msra.mxu0 0.0
    %147 = vmatprep.subr.mxu0 0.0
    %148 = vmatpush2.msra.mxu0 0.0
    %149 = vmatprep.subr.mxu0 0.0
    %150 = vmatpush2.msra.mxu0 0.0
    %151 = vmatprep.subr.mxu0 0.0
    %152 = vmatpush2.msra.mxu0 0.0
    %153 = vmatprep.mubr.f32.mxu0 0.0
    %154 = vmatmul.mubr.f32.gmra.mxu0 %v43
    %v155 = vpop.f32.mrf.mxu0
    %v156 = vadd.f32 %v82, %v155
    %v157 = vpop.f32.mrf.mxu0
    %v158 = vadd.f32 %v86, %v157
    %159 = vmatprep.mubr.f32.mxu0 0.0
    %160 = vmatmul.mubr.f32.gmra.mxu0 %v44
    %v161 = vpop.f32.mrf.mxu0
    %v162 = vadd.f32 %v82, %v161
    %v163 = vpop.f32.mrf.mxu0
    %v164 = vadd.f32 %v86, %v163
    %165 = vdwg.mxu0
    %166 = vst [vmem:[#allocation7] sm:$0xff] %v156
    %167 = vst [vmem:[#allocation7 + $0x8] sm:$0xff] %v158
    %168 = vst [vmem:[#allocation7 + $0x10] sm:$0xff] %v162
    %169 = vst [vmem:[#allocation7 + $0x18] sm:$0xff] %v164
    // Predicated region
    $region22: #{tpu_custom_call.1} parent=1 // pred_check
      _
    $region23: #{tpu_custom_call.1} parent=1 // pred_check_branch
      %171 = sbr.rel (0) target = $region25
    $region24: #{tpu_custom_call.1} parent=1 // pred_region
      %s173 = ssub.s32 512, 512
      %174 = vsyncadd [#allocation4], %s173
      %s175 = sshll.u32 [#allocation7], 4
      %s176 = int_to_ptr.vmem [resolvable:$true] %s175
      %181 = dma.vmem_to_hbm [thread:$0]  %s176, 512, %s3, [#allocation4], 256, 256, 16
    $region25: #{tpu_custom_call.1} parent=1 // pred_fallthru
      _
    // Predicated region
    $region26: #{tpu_custom_call.1} parent=1 // pred_check
      _
    $region27: #{tpu_custom_call.1} parent=1 // pred_check_branch
      %183 = sbr.rel (0) target = $region29
    $region28: #{tpu_custom_call.1} parent=1 // pred_region
      %184 = dma.done [#allocation4], 512
    $region29: #{tpu_custom_call.1} parent=1 // pred_fallthru
      _
    %185 = vsyncpa [#allocation3], 1
    %186 = vsyncpa [#allocation6], 1
    %187 = vsyncpa [#allocation4], 1

</llo_original>
